<compile_context>
chip_gen: v7x
topology: tpu7x:2x2x1
jax: 0.10.0
libtpu: 0.0.40
codegen_flags: <defaults>
</compile_context>

<pallas_src>
import math

import jax
import jax.numpy as jnp
from jax.experimental import pallas as pl
from jax.experimental.pallas import tpu as pltpu


def _round_up(x, m):
    return ((x + m - 1) // m) * m


def _ffn_kernel(x_ref, w1_ref, b1_ref, w2_ref, b2_ref, o_ref):
    """Fused Linear -> SiLU -> Linear on one lane-dense row-slab tile.

    All refs are lane dense (last dim a multiple of 128).  The hidden
    (tile, pack*hidden_dim) activation never leaves VMEM/vregs.
    """
    x = x_ref[...].astype(w1_ref.dtype)                               # in-kernel f32->bf16
    h = jnp.dot(x, w1_ref[...], preferred_element_type=jnp.float32)   # MXU, f32 acc
    h = h + b1_ref[...]                                               # f32
    h = h * jax.nn.sigmoid(h)                                         # SiLU in f32 (EUP/VPU)
    y = jnp.dot(h.astype(w2_ref.dtype), w2_ref[...],                  # MXU, f32 acc
                preferred_element_type=jnp.float32)
    y = y + b2_ref[...]
    o_ref[...] = y.astype(o_ref.dtype)                                # full-lane stores
    # Dropout(p=0.0) == identity, omitted.


def feedforward(x, params, *, block_m=512):
    """FeedForward forward pass: SiLU(x @ w1 + b1) @ w2 + b2.

    x: (..., dim); leading dims flatten onto the row axis.
    params: from make_feedforward_params (holds lane-packed kernel weights).
    """
    w1k, b1k, w2k, b2k = params["w1k"], params["b1k"], params["w2k"], params["b2k"]
    lead, D = x.shape[:-1], x.shape[-1]
    M = math.prod(lead) if lead else 1
    pack = w1k.shape[0] // D                      # static (from shapes), no traced leaf

    x2 = x.reshape(M, D)                          # metadata only; no astype here (opt #4)

    if M % pack != 0:
        # Rare path: a valid row would otherwise share a slab row with garbage
        # (inf*0=NaN risk through the zero blocks), so zero-pad up to `pack`.
        extra = pack - M % pack
        x2 = jnp.pad(x2, ((0, extra), (0, 0)))
        Mq = M + extra
    else:
        Mq = M

    # Row tile: multiple of 16 (bf16 sublane packing) and of 8*pack (slab sublanes),
    # capped at block_m; force >=2 grid steps when possible so v7x's 2 TCs both work.
    mult = max(16, 8 * pack)
    tm = min(_round_up(block_m, mult), _round_up(Mq, mult))
    if pl.cdiv(Mq, tm) < 2 and Mq > mult:
        tm = _round_up(pl.cdiv(Mq, 2), mult)
    grid = pl.cdiv(Mq, tm)

    Dp = D * pack                                 # 128 on the slab path
    ts = tm // pack                               # slab rows per tile (multiple of 8)
    Ms = Mq // pack                               # valid slab rows (last tile may be ragged)
    Mp = grid * ts                                # output slab rows incl. boundary padding

    x_slab = x2.reshape(Ms, Dp)                   # contiguous row-major reshape -> free

    out = pl.pallas_call(
        _ffn_kernel,
        out_shape=jax.ShapeDtypeStruct((Mp, Dp), x.dtype),   # final dtype (opt #5)
        grid=(grid,),
        in_specs=[
            pl.BlockSpec((ts, Dp), lambda i: (i, 0)),        # x slab tile (lane dense)
            pl.BlockSpec(w1k.shape, lambda i: (0, 0)),       # w1 block-diag, VMEM-resident
            pl.BlockSpec(b1k.shape, lambda i: (0, 0)),       # b1 (1, pack*H)
            pl.BlockSpec(w2k.shape, lambda i: (0, 0)),       # w2 block-diag, VMEM-resident
            pl.BlockSpec(b2k.shape, lambda i: (0, 0)),       # b2 (1, pack*D)
        ],
        out_specs=pl.BlockSpec((ts, Dp), lambda i: (i, 0)),  # lane-dense output slab
        compiler_params=pltpu.CompilerParams(
            # Row tiles are independent -> shard grid across TensorCores (v7x).
            dimension_semantics=("parallel",),
        ),
    )(x_slab, w1k, b1k, w2k, b2k)

    # Contiguous un-pack + drop boundary rows; output already in x.dtype.
    return out.reshape(Mp * pack, D)[:M].reshape(*lead, D)


# -----------------------------------------------------------------------------
# parameters & pure-JAX reference
# -----------------------------------------------------------------------------
def _block_diag(w, pack):
    d0, d1 = w.shape
    out = jnp.zeros((pack * d0, pack * d1), w.dtype)
    for p in range(pack):
        out = out.at[p * d0:(p + 1) * d0, p * d1:(p + 1) * d1].set(w)
    return out


def make_feedforward_params(key, dim, hidden_dim):
    k1, k2, k3, k4 = jax.random.split(key, 4)
    w1 = jax.random.normal(k1, (dim, hidden_dim), jnp.float32) * dim ** -0.5
    b1 = 0.1 * jax.random.normal(k2, (hidden_dim,), jnp.float32)
    w2 = jax.random.normal(k3, (hidden_dim, dim), jnp.float32) * hidden_dim ** -0.5
    b2 = 0.1 * jax.random.normal(k4, (dim,), jnp.float32)

    # Kernel weights built ONCE here (not per call): bf16 (native MXU operand dtype),
    # block-diagonal packed so `pack` token rows share one 128-lane slab row.
    pack = 128 // dim if (dim < 128 and 128 % dim == 0) else 1
    w1b, w2b = w1.astype(jnp.bfloat16), w2.astype(jnp.bfloat16)
    w1k = _block_diag(w1b, pack) if pack > 1 else w1b        # (pack*D, pack*H)
    w2k = _block_diag(w2b, pack) if pack > 1 else w2b        # (pack*H, pack*D)
    b1k = jnp.tile(b1, pack).reshape(1, pack * hidden_dim)   # f32
    b2k = jnp.tile(b2, pack).reshape(1, pack * dim)          # f32

    return {
        # reference / canonical weights (bf16-quantized, the accepted accuracy contract)
        "w1": w1b, "b1": b1, "w2": w2b, "b2": b2,
        # kernel-side packed weights
        "w1k": w1k, "b1k": b1k, "w2k": w2k, "b2k": b2k,
    }


def feedforward_reference(x, params):
    """Pure-JAX f32 reference of the PyTorch module (Dropout p=0.0 = identity)."""
    w1 = params["w1"].astype(jnp.float32)
    w2 = params["w2"].astype(jnp.float32)
    h = x.astype(jnp.float32) @ w1 + params["b1"]
    h = h * jax.nn.sigmoid(h)
    return h @ w2 + params["b2"]


# -----------------------------------------------------------------------------
if __name__ == "__main__":
    # Shapes as the MobileViT transformer uses FeedForward:
    # x is (batch, patch_area, tokens, dim); FeedForward(dim=64, hidden_dim=256).
    DIM, HIDDEN = 64, 256
    key = jax.random.PRNGKey(0)
    pkey, xkey = jax.random.split(key)
    params = make_feedforward_params(pkey, DIM, HIDDEN)
    x = jax.random.normal(xkey, (2, 4, 16, DIM), jnp.float32)   # M = 128 rows -> grid (2,)

    fwd = jax.jit(feedforward)
    out = jax.block_until_ready(fwd(x, params))

    assert out.shape == x.shape, out.shape
    assert out.dtype == x.dtype, out.dtype
    assert bool(jnp.all(jnp.isfinite(out)))

    ref = feedforward_reference(x, params)
    max_err = float(jnp.max(jnp.abs(out - ref)))
    # bf16 MXU operands (x and activations cast in-kernel) with f32 accumulation.
    assert max_err < 5e-2, max_err

    print("KERNEL_OK")
</pallas_src>

<mosaic_0001>
module attributes {stable_mosaic.version = 11 : i64} {
  func.func @_ffn_kernel(%arg0: i32, %arg1: memref<32x128xf32, #tpu.memory_space<vmem>>, %arg2: memref<128x512xbf16, #tpu.memory_space<vmem>>, %arg3: memref<1x512xf32, #tpu.memory_space<vmem>>, %arg4: memref<512x128xbf16, #tpu.memory_space<vmem>>, %arg5: memref<1x128xf32, #tpu.memory_space<vmem>>, %arg6: memref<32x128xf32, #tpu.memory_space<vmem>>) attributes {dimension_semantics = [#tpu.dimension_semantics<parallel>], iteration_bounds = array<i64: 2>, scalar_prefetch = 0 : i64, scratch_operands = 0 : i64, tpu.core_type = #tpu.core_type<tc>, window_params = [{transform_indices = @transform_0, window_bounds = array<i64: 32, 128>}, {pipeline_mode = #tpu.pipeline_mode<synchronous>, transform_indices = @transform_1, window_bounds = array<i64: 128, 512>}, {pipeline_mode = #tpu.pipeline_mode<synchronous>, transform_indices = @transform_2, window_bounds = array<i64: 1, 512>}, {pipeline_mode = #tpu.pipeline_mode<synchronous>, transform_indices = @transform_3, window_bounds = array<i64: 512, 128>}, {pipeline_mode = #tpu.pipeline_mode<synchronous>, transform_indices = @transform_4, window_bounds = array<i64: 1, 128>}, {transform_indices = @transform_5, window_bounds = array<i64: 32, 128>}]} {
    %c0 = arith.constant 0 : index
    %c0_0 = arith.constant 0 : index
    %0 = vector.load %arg1[%c0, %c0_0] : memref<32x128xf32, #tpu.memory_space<vmem>>, vector<32x128xf32>
    %1 = arith.truncf %0 : vector<32x128xf32> to vector<32x128xbf16>
    %c0_1 = arith.constant 0 : index
    %c0_2 = arith.constant 0 : index
    %2 = vector.load %arg2[%c0_1, %c0_2] : memref<128x512xbf16, #tpu.memory_space<vmem>>, vector<128x512xbf16>
    %cst = arith.constant dense<0.000000e+00> : vector<32x512xf32>
    %3 = tpu.matmul %1, %2, %cst {dimension_numbers = #tpu.dot_dimension_numbers<[1], [0], [0], [1], [0, 0, 1, 1], [], []>} : vector<32x128xbf16>, vector<128x512xbf16>, vector<32x512xf32> -> vector<32x512xf32>
    %c0_3 = arith.constant 0 : index
    %c0_4 = arith.constant 0 : index
    %4 = vector.load %arg3[%c0_3, %c0_4] : memref<1x512xf32, #tpu.memory_space<vmem>>, vector<1x512xf32>
    %5 = vector.broadcast %4 : vector<1x512xf32> to vector<32x512xf32>
    %6 = arith.addf %3, %5 : vector<32x512xf32>
    %7 = arith.negf %6 : vector<32x512xf32>
    %8 = math.exp %7 : vector<32x512xf32>
    %cst_5 = arith.constant 1.000000e+00 : f32
    %9 = vector.broadcast %cst_5 : f32 to vector<32x512xf32>
    %10 = arith.addf %9, %8 : vector<32x512xf32>
    %11 = arith.divf %9, %10 : vector<32x512xf32>
    %12 = arith.mulf %6, %11 : vector<32x512xf32>
    %13 = arith.truncf %12 : vector<32x512xf32> to vector<32x512xbf16>
    %c0_6 = arith.constant 0 : index
    %c0_7 = arith.constant 0 : index
    %14 = vector.load %arg4[%c0_6, %c0_7] : memref<512x128xbf16, #tpu.memory_space<vmem>>, vector<512x128xbf16>
    %cst_8 = arith.constant dense<0.000000e+00> : vector<32x128xf32>
    %15 = tpu.matmul %13, %14, %cst_8 {dimension_numbers = #tpu.dot_dimension_numbers<[1], [0], [0], [1], [0, 0, 1, 1], [], []>} : vector<32x512xbf16>, vector<512x128xbf16>, vector<32x128xf32> -> vector<32x128xf32>
    %c0_9 = arith.constant 0 : index
    %c0_10 = arith.constant 0 : index
    %16 = vector.load %arg5[%c0_9, %c0_10] : memref<1x128xf32, #tpu.memory_space<vmem>>, vector<1x128xf32>
    %17 = vector.broadcast %16 : vector<1x128xf32> to vector<32x128xf32>
    %18 = arith.addf %15, %17 : vector<32x128xf32>
    %c0_11 = arith.constant 0 : index
    %c0_12 = arith.constant 0 : index
    %19 = vector.load %arg6[%c0_11, %c0_12] : memref<32x128xf32, #tpu.memory_space<vmem>>, vector<32x128xf32>
    tpu.vector_store %arg6[%c0_11, %c0_12], %18 {strides = array<i32>} : memref<32x128xf32, #tpu.memory_space<vmem>>, vector<32x128xf32>,
    return
  }
  func.func @transform_0(%arg0: i32) -> (i32, i32) {
    %c0_i32 = arith.constant 0 : i32
    %c0_i32_0 = arith.constant 0 : i32
    return %arg0, %c0_i32 : i32, i32
  }
  func.func @transform_1(%arg0: i32) -> (i32, i32) {
    %c0_i32 = arith.constant 0 : i32
    %c0_i32_0 = arith.constant 0 : i32
    %c0_i32_1 = arith.constant 0 : i32
    return %c0_i32, %c0_i32_0 : i32, i32
  }
  func.func @transform_2(%arg0: i32) -> (i32, i32) {
    %c0_i32 = arith.constant 0 : i32
    %c0_i32_0 = arith.constant 0 : i32
    %c0_i32_1 = arith.constant 0 : i32
    return %c0_i32, %c0_i32_0 : i32, i32
  }
  func.func @transform_3(%arg0: i32) -> (i32, i32) {
    %c0_i32 = arith.constant 0 : i32
    %c0_i32_0 = arith.constant 0 : i32
    %c0_i32_1 = arith.constant 0 : i32
    return %c0_i32, %c0_i32_0 : i32, i32
  }
  func.func @transform_4(%arg0: i32) -> (i32, i32) {
    %c0_i32 = arith.constant 0 : i32
    %c0_i32_0 = arith.constant 0 : i32
    %c0_i32_1 = arith.constant 0 : i32
    return %c0_i32, %c0_i32_0 : i32, i32
  }
  func.func @transform_5(%arg0: i32) -> (i32, i32) {
    %c0_i32 = arith.constant 0 : i32
    %c0_i32_0 = arith.constant 0 : i32
    return %arg0, %c0_i32 : i32, i32
  }
}

</mosaic_0001>

<llo_original>
// kernel: feedforward.1
$region0: #{feedforward.1}
  #allocation0 [shape = 'u32[]', space=smem, size = 0x4, offset = 0x4, fixed_abs, tag = 'smem constant byte address 0x4 - core index']
  #allocation1 [shape = 'u32[144,128]{1,0:T(1,128)}', space=vmem, size = 0x12000, scoped, tag = 'internal scratch']
  %s0 = inlined_call_operand.vmem [shape: f32[64,128], index: 0, kind: input, shape index: {}]
  %s1 = inlined_call_operand.hbm [shape: bf16[128,512], index: 1, kind: input, shape index: {}]
  %s2 = inlined_call_operand.vmem [shape: f32[1,512], index: 2, kind: input, shape index: {}]
  %s3 = inlined_call_operand.hbm [shape: bf16[512,128], index: 3, kind: input, shape index: {}]
  %s4 = inlined_call_operand.vmem [shape: f32[1,128], index: 4, kind: input, shape index: {}]
  %s5 = inlined_call_operand.vmem [shape: f32[64,128], index: 5, kind: output, shape index: {}]
  %s6 = sld [smem:[#allocation0]]
  $region61: #{feedforward.1} parent=0
    _
  %s8 = ssub.s32 1, %s6
  %s9 = scalar_select 0, %s8, %s6
  $region1: #{feedforward.1} parent=0
    #allocation2 [shape = 'u8[131072]{0}', space=vmem, size = 0x20000, scoped, tag = 'input window, operand 1, single buffered']
    #allocation3 [shape = 's32[2]{0}', space=sflag, size = 0x8, scoped, tag = 'scoped memory for feedforward.1']
    #allocation4 [shape = 'u8[131072]{0}', space=vmem, size = 0x20000, scoped, tag = 'input window, operand 3, single buffered']
    #allocation5 [shape = 's32[1]{0}', space=sflag, size = 0x4, scoped, tag = 'scoped memory for feedforward.1']
    %10 = vsyncpa [#allocation3], 0
    %11 = vsyncpa [#allocation5], 0
    loop: start=0, step=1, limit=4
    $region2: #{feedforward.1} parent=1 // loop_pre_header
      _
    $region3: #{feedforward.1} parent=1 // loop_header
      %s13 = sphi 0, %s17
      %p14 = scmp.ge.s32.totalorder %s13, 4
      %s23 = sphi 0, %s25
      %s26 = sphi 0, %s23
      %s27 = sphi 0, %s26
      %s43 = sphi 0, %s27
      %s47 = sphi 0, %s47
      %s49 = sphi 0, %s47
      %s50 = sphi 0, %s49
      %s64 = sphi 0, %s50
      %s68 = sphi 0, %s68
      %s70 = sphi 0, %s68
      %s71 = sphi 0, %s70
      %s85 = sphi 0, %s71
      %s89 = sphi 0, %s89
      %s91 = sphi 0, %s89
      %s92 = sphi 0, %s91
      %s106 = sphi 0, %s92
      %s110 = sphi 0, %s110
      %s112 = sphi 0, %s110
      %s113 = sphi 0, %s112
      %s127 = sphi 0, %s113
      %s133 = sphi 0, %s135
      %s136 = sphi 0, %s133
      %s137 = sphi 0, %s136
      %s153 = sphi 0, %s137
    $region4: #{feedforward.1} parent=1 // loop_header_branch
      %16 = sbr.rel (%p14) target = $region8
    $region5: #{feedforward.1} parent=1 // loop_body
      %s18 = ssub.s32 %s13, 1
      %s19 = ssub.s32 %s13, 2
      %s20 = sadd.s32 %s13, 1
      %s21 = ssub.s32 %s13, %s20
      %p22 = scmp.eq.s32.totalorder %s21, 0
      %s24 = sadd.s32 %s23, 1
      %s25 = scalar_select %p22, %s23, %s24
      %p28 = pneg %p22
      %p29 = scmp.eq.s32.totalorder %s13, 1
      %p30 = por %p28, %p29
      %p31 = scmp.ne.s32.totalorder %s23, %s26
      %p32 = scmp.eq.s32.totalorder %s13, 0
      %p33 = por %p31, %p32
      %p34 = scmp.ne.s32.totalorder %s23, %s26
      %p35 = scmp.eq.s32.totalorder %s18, 1
      %p36 = por %p34, %p35
      %p37 = scmp.ne.s32.totalorder %s26, %s27
      %p38 = scmp.eq.s32.totalorder %s18, 0
      %p39 = por %p37, %p38
      %p40 = scmp.ne.s32.totalorder %s26, %s27
      %p41 = scmp.eq.s32.totalorder %s19, 1
      %p42 = por %p40, %p41
      %p44 = scmp.ne.s32.totalorder %s27, %s43
      %p45 = scmp.eq.s32.totalorder %s19, 0
      %p46 = por %p44, %p45
      %s48 = sadd.s32 %s47, 1
      %p51 = scmp.eq.s32.totalorder %s13, 1
      %p52 = scmp.ne.s32.totalorder %s47, %s49
      %p53 = scmp.eq.s32.totalorder %s13, 0
      %p54 = por %p52, %p53
      %p55 = scmp.ne.s32.totalorder %s47, %s49
      %p56 = scmp.eq.s32.totalorder %s18, 1
      %p57 = por %p55, %p56
      %p58 = scmp.ne.s32.totalorder %s49, %s50
      %p59 = scmp.eq.s32.totalorder %s18, 0
      %p60 = por %p58, %p59
      %p61 = scmp.ne.s32.totalorder %s49, %s50
      %p62 = scmp.eq.s32.totalorder %s19, 1
      %p63 = por %p61, %p62
      %p65 = scmp.ne.s32.totalorder %s50, %s64
      %p66 = scmp.eq.s32.totalorder %s19, 0
      %p67 = por %p65, %p66
      %s69 = sadd.s32 %s68, 1
      %p72 = scmp.eq.s32.totalorder %s13, 1
      %p73 = scmp.ne.s32.totalorder %s68, %s70
      %p74 = scmp.eq.s32.totalorder %s13, 0
      %p75 = por %p73, %p74
      %p76 = scmp.ne.s32.totalorder %s68, %s70
      %p77 = scmp.eq.s32.totalorder %s18, 1
      %p78 = por %p76, %p77
      %p79 = scmp.ne.s32.totalorder %s70, %s71
      %p80 = scmp.eq.s32.totalorder %s18, 0
      %p81 = por %p79, %p80
      %p82 = scmp.ne.s32.totalorder %s70, %s71
      %p83 = scmp.eq.s32.totalorder %s19, 1
      %p84 = por %p82, %p83
      %p86 = scmp.ne.s32.totalorder %s71, %s85
      %p87 = scmp.eq.s32.totalorder %s19, 0
      %p88 = por %p86, %p87
      %s90 = sadd.s32 %s89, 1
      %p93 = scmp.eq.s32.totalorder %s13, 1
      %p94 = scmp.ne.s32.totalorder %s89, %s91
      %p95 = scmp.eq.s32.totalorder %s13, 0
      %p96 = por %p94, %p95
      %p97 = scmp.ne.s32.totalorder %s89, %s91
      %p98 = scmp.eq.s32.totalorder %s18, 1
      %p99 = por %p97, %p98
      %p100 = scmp.ne.s32.totalorder %s91, %s92
      %p101 = scmp.eq.s32.totalorder %s18, 0
      %p102 = por %p100, %p101
      %p103 = scmp.ne.s32.totalorder %s91, %s92
      %p104 = scmp.eq.s32.totalorder %s19, 1
      %p105 = por %p103, %p104
      %p107 = scmp.ne.s32.totalorder %s92, %s106
      %p108 = scmp.eq.s32.totalorder %s19, 0
      %p109 = por %p107, %p108
      %s111 = sadd.s32 %s110, 1
      %p114 = scmp.eq.s32.totalorder %s13, 1
      %p115 = scmp.ne.s32.totalorder %s110, %s112
      %p116 = scmp.eq.s32.totalorder %s13, 0
      %p117 = por %p115, %p116
      %p118 = scmp.ne.s32.totalorder %s110, %s112
      %p119 = scmp.eq.s32.totalorder %s18, 1
      %p120 = por %p118, %p119
      %p121 = scmp.ne.s32.totalorder %s112, %s113
      %p122 = scmp.eq.s32.totalorder %s18, 0
      %p123 = por %p121, %p122
      %p124 = scmp.ne.s32.totalorder %s112, %s113
      %p125 = scmp.eq.s32.totalorder %s19, 1
      %p126 = por %p124, %p125
      %p128 = scmp.ne.s32.totalorder %s113, %s127
      %p129 = scmp.eq.s32.totalorder %s19, 0
      %p130 = por %p128, %p129
      %s131 = ssub.s32 %s13, %s20
      %p132 = scmp.eq.s32.totalorder %s131, 0
      %s134 = sadd.s32 %s133, 1
      %s135 = scalar_select %p132, %s133, %s134
      %p138 = pneg %p132
      %p139 = scmp.eq.s32.totalorder %s13, 1
      %p140 = por %p138, %p139
      %p141 = scmp.ne.s32.totalorder %s133, %s136
      %p142 = scmp.eq.s32.totalorder %s13, 0
      %p143 = por %p141, %p142
      %p144 = scmp.ne.s32.totalorder %s133, %s136
      %p145 = scmp.eq.s32.totalorder %s18, 1
      %p146 = por %p144, %p145
      %p147 = scmp.ne.s32.totalorder %s136, %s137
      %p148 = scmp.eq.s32.totalorder %s18, 0
      %p149 = por %p147, %p148
      %p150 = scmp.ne.s32.totalorder %s136, %s137
      %p151 = scmp.eq.s32.totalorder %s19, 1
      %p152 = por %p150, %p151
      %p154 = scmp.ne.s32.totalorder %s137, %s153
      %p155 = scmp.eq.s32.totalorder %s19, 0
      %p156 = por %p154, %p155
      %p157 = scmp.le.s32.totalorder 1, %s13
      %p158 = scmp.lt.s32.totalorder %s13, 3
      %p159 = pnand %p157, %p158
      %p160 = pneg %p159
      // Predicated region
      $region9: #{feedforward.1} parent=5 // pred_check
        _
      $region10: #{feedforward.1} parent=5 // pred_check_branch
        %162 = sbr.rel (%p159) target = $region12
      $region11: #{feedforward.1} parent=5 // pred_region
        %s163 = ssub.s32 %s13, 1
        // Predicated region
        $region13: #{feedforward.1} parent=11 // pred_check
          %p164 = pneg %p60
        $region14: #{feedforward.1} parent=11 // pred_check_branch
          %166 = sbr.rel (%p164) target = $region16
        $region15: #{feedforward.1} parent=11 // pred_region
          %s168 = ssub.s32 4096, 4096
          %169 = vsyncadd [#allocation3], %s168
          %s170 = sshll.u32 [#allocation2], 4
          %s171 = int_to_ptr.vmem [resolvable:$true] %s170
          %176 = dma.hbm_to_vmem [thread:$0]  %s1, 4096, %s171, [#allocation3], 256, 256, 16
        $region16: #{feedforward.1} parent=11 // pred_fallthru
          _
        // Predicated region
        $region17: #{feedforward.1} parent=11 // pred_check
          %p177 = pneg %p81
        $region18: #{feedforward.1} parent=11 // pred_check_branch
          %179 = sbr.rel (%p177) target = $region20
        $region19: #{feedforward.1} parent=11 // pred_region
          _
        $region20: #{feedforward.1} parent=11 // pred_fallthru
          _
        // Predicated region
        $region21: #{feedforward.1} parent=11 // pred_check
          %p180 = pneg %p102
        $region22: #{feedforward.1} parent=11 // pred_check_branch
          %182 = sbr.rel (%p180) target = $region24
        $region23: #{feedforward.1} parent=11 // pred_region
          %s184 = ssub.s32 4096, 4096
          %185 = vsyncadd [#allocation5], %s184
          %s186 = sshll.u32 [#allocation4], 4
          %s187 = int_to_ptr.vmem [resolvable:$true] %s186
          %192 = dma.hbm_to_vmem [thread:$0]  %s3, 4096, %s187, [#allocation5], 64, 64, 4
        $region24: #{feedforward.1} parent=11 // pred_fallthru
          _
        // Predicated region
        $region25: #{feedforward.1} parent=11 // pred_check
          %p193 = pneg %p123
        $region26: #{feedforward.1} parent=11 // pred_check_branch
          %195 = sbr.rel (%p193) target = $region28
        $region27: #{feedforward.1} parent=11 // pred_region
          _
        $region28: #{feedforward.1} parent=11 // pred_fallthru
          _
      $region12: #{feedforward.1} parent=5 // pred_fallthru
        _
      %p196 = scmp.lt.s32.totalorder %s13, 2
      // Predicated region
      $region29: #{feedforward.1} parent=5 // pred_check
        %p197 = pneg %p196
      $region30: #{feedforward.1} parent=5 // pred_check_branch
        %199 = sbr.rel (%p197) target = $region32
      $region31: #{feedforward.1} parent=5 // pred_region
        // Predicated region
        $region33: #{feedforward.1} parent=31 // pred_check
          %p200 = pneg %p33
        $region34: #{feedforward.1} parent=31 // pred_check_branch
          %202 = sbr.rel (%p200) target = $region36
        $region35: #{feedforward.1} parent=31 // pred_region
          %s203 = smul.u32 4, %s13
          %p204 = scmp.lt.s32.totalorder %s203, 7
          %s205 = scalar_select %p204, %s203, 7
          %s206 = smul.addr %s205, 8
          %s207 = scalar_lea.vmem %s0, %s206
          %s208 = smul.u32 4, %s13
        $region36: #{feedforward.1} parent=31 // pred_fallthru
          _
      $region32: #{feedforward.1} parent=5 // pred_fallthru
        _
      %p209 = scmp.le.s32.totalorder 1, %s13
      %p210 = scmp.lt.s32.totalorder %s13, 3
      %p211 = pnand %p209, %p210
      %p212 = pneg %p211
      // Predicated region
      $region37: #{feedforward.1} parent=5 // pred_check
        _
      $region38: #{feedforward.1} parent=5 // pred_check_branch
        %214 = sbr.rel (%p211) target = $region40
      $region39: #{feedforward.1} parent=5 // pred_region
        %s215 = ssub.s32 %s13, 1
        // Predicated region
        $region41: #{feedforward.1} parent=39 // pred_check
          %p216 = pneg %p60
        $region42: #{feedforward.1} parent=39 // pred_check_branch
          %218 = sbr.rel (%p216) target = $region44
        $region43: #{feedforward.1} parent=39 // pred_region
          %219 = dma.done [#allocation3], 4096
        $region44: #{feedforward.1} parent=39 // pred_fallthru
          _
        // Predicated region
        $region45: #{feedforward.1} parent=39 // pred_check
          %p220 = pneg %p102
        $region46: #{feedforward.1} parent=39 // pred_check_branch
          %222 = sbr.rel (%p220) target = $region48
        $region47: #{feedforward.1} parent=39 // pred_region
          %223 = dma.done [#allocation5], 4096
        $region48: #{feedforward.1} parent=39 // pred_fallthru
          _
        %s224 = smul.u32 4, %s18
        %p225 = scmp.lt.s32.totalorder %s224, 7
        %s226 = scalar_select %p225, %s224, 7
        %s227 = smul.addr %s226, 8
        %s228 = scalar_lea.vmem %s0, %s227
        %p229 = pneg %p39
        %p230 = pneg %p36
        %p231 = pneg %p60
        %p232 = pneg %p57
        %p233 = pneg %p81
        %p234 = pneg %p78
        %p235 = pneg %p102
        %p236 = pneg %p99
        %p237 = pneg %p123
        %p238 = pneg %p120
        %p239 = pneg %p149
        %p240 = pneg %p146
        %s241 = smul.u32 4, %s18
        %p242 = scmp.lt.s32.totalorder %s241, 7
        %s243 = scalar_select %p242, %s241, 7
        %s244 = smul.addr %s243, 8
        %s245 = scalar_lea.vmem %s5, %s244
        %s246 = smul.u32 4, %s18
        %p247 = scmp.lt.s32.totalorder %s246, 7
        %s248 = scalar_select %p247, %s246, 7
        %s249 = smul.addr %s248, 8
        %s250 = scalar_lea.vmem %s0, %s249
        %s251 = smul.u32 4, %s18
        %s252 = smul.u32 4, %s18
        %p253 = scmp.lt.s32.totalorder %s252, 7
        %s254 = scalar_select %p253, %s252, 7
        %s255 = smul.addr %s254, 8
        %s256 = scalar_lea.vmem %s5, %s255
        %s257 = smul.u32 4, %s18
        %v259 = vld [vmem:[%s250] sm:$0xff]
        %v260 = vld [vmem:[%s250 + $0x8] sm:$0xff]
        %v261 = vld [vmem:[%s250 + $0x10] sm:$0xff]
        %v262 = vld [vmem:[%s250 + $0x18] sm:$0xff]
        %v263 = vpack.c.bf16 %v260, %v259
        %v264 = vpack.c.bf16 %v262, %v261
        %v265 = vld [vmem:[#allocation2] sm:$0xff]
        %v266 = vld [vmem:[#allocation2 + $0x8] sm:$0xff]
        %v267 = vld [vmem:[#allocation2 + $0x10] sm:$0xff]
        %v268 = vld [vmem:[#allocation2 + $0x18] sm:$0xff]
        %v269 = vld [vmem:[#allocation2 + $0x20] sm:$0xff]
        %v270 = vld [vmem:[#allocation2 + $0x28] sm:$0xff]
        %v271 = vld [vmem:[#allocation2 + $0x30] sm:$0xff]
        %v272 = vld [vmem:[#allocation2 + $0x38] sm:$0xff]
        %v273 = vld [vmem:[#allocation2 + $0x40] sm:$0xff]
        %v274 = vld [vmem:[#allocation2 + $0x48] sm:$0xff]
        %v275 = vld [vmem:[#allocation2 + $0x50] sm:$0xff]
        %v276 = vld [vmem:[#allocation2 + $0x58] sm:$0xff]
        %v277 = vld [vmem:[#allocation2 + $0x60] sm:$0xff]
        %v278 = vld [vmem:[#allocation2 + $0x68] sm:$0xff]
        %v279 = vld [vmem:[#allocation2 + $0x70] sm:$0xff]
        %v280 = vld [vmem:[#allocation2 + $0x78] sm:$0xff]
        %v281 = vld [vmem:[#allocation2 + $0x80] sm:$0xff]
        %v282 = vld [vmem:[#allocation2 + $0x88] sm:$0xff]
        %v283 = vld [vmem:[#allocation2 + $0x90] sm:$0xff]
        %v284 = vld [vmem:[#allocation2 + $0x98] sm:$0xff]
        %v285 = vld [vmem:[#allocation2 + $0xa0] sm:$0xff]
        %v286 = vld [vmem:[#allocation2 + $0xa8] sm:$0xff]
        %v287 = vld [vmem:[#allocation2 + $0xb0] sm:$0xff]
        %v288 = vld [vmem:[#allocation2 + $0xb8] sm:$0xff]
        %v289 = vld [vmem:[#allocation2 + $0xc0] sm:$0xff]
        %v290 = vld [vmem:[#allocation2 + $0xc8] sm:$0xff]
        %v291 = vld [vmem:[#allocation2 + $0xd0] sm:$0xff]
        %v292 = vld [vmem:[#allocation2 + $0xd8] sm:$0xff]
        %v293 = vld [vmem:[#allocation2 + $0xe0] sm:$0xff]
        %v294 = vld [vmem:[#allocation2 + $0xe8] sm:$0xff]
        %v295 = vld [vmem:[#allocation2 + $0xf0] sm:$0xff]
        %v296 = vld [vmem:[#allocation2 + $0xf8] sm:$0xff]
        %v297 = vld [vmem:[%s2] sm:$0xf]
        %v299 = vlaneseq
        %v300 = vshrl.u32 %v299, 7
        %v301 = vsub.s32 0, %v300
        %v302 = vrot.slane %v297, %v301
        %v303 = vlaneseq
        %v304 = vshrl.u32 %v303, 7
        %v305 = vsub.s32 1, %v304
        %v306 = vrot.slane %v297, %v305
        %v307 = vlaneseq
        %v308 = vshrl.u32 %v307, 7
        %v309 = vsub.s32 2, %v308
        %v310 = vrot.slane %v297, %v309
        %v311 = vlaneseq
        %v312 = vshrl.u32 %v311, 7
        %v313 = vsub.s32 3, %v312
        %v314 = vrot.slane %v297, %v313
        %v351 = vunpack.c.l.b16 %v265
        %v352 = vunpack.c.h.b16 %v265
        %v353 = vunpack.c.l.b16 %v266
        %v354 = vunpack.c.h.b16 %v266
        %v355 = vunpack.c.l.b16 %v267
        %v356 = vunpack.c.h.b16 %v267
        %v357 = vunpack.c.l.b16 %v268
        %v358 = vunpack.c.h.b16 %v268
        %v359 = vunpack.c.l.b16 %v269
        %v360 = vunpack.c.h.b16 %v269
        %v361 = vunpack.c.l.b16 %v270
        %v362 = vunpack.c.h.b16 %v270
        %v363 = vunpack.c.l.b16 %v271
        %v364 = vunpack.c.h.b16 %v271
        %v365 = vunpack.c.l.b16 %v272
        %v366 = vunpack.c.h.b16 %v272
        %v367 = vunpack.c.l.b16 %v273
        %v368 = vunpack.c.h.b16 %v273
        %v369 = vunpack.c.l.b16 %v274
        %v370 = vunpack.c.h.b16 %v274
        %v371 = vunpack.c.l.b16 %v275
        %v372 = vunpack.c.h.b16 %v275
        %v373 = vunpack.c.l.b16 %v276
        %v374 = vunpack.c.h.b16 %v276
        %v375 = vunpack.c.l.b16 %v277
        %v376 = vunpack.c.h.b16 %v277
        %v377 = vunpack.c.l.b16 %v278
        %v378 = vunpack.c.h.b16 %v278
        %v379 = vunpack.c.l.b16 %v279
        %v380 = vunpack.c.h.b16 %v279
        %v381 = vunpack.c.l.b16 %v280
        %v382 = vunpack.c.h.b16 %v280
        %v383 = vunpack.c.l.b16 %v281
        %v384 = vunpack.c.h.b16 %v281
        %v385 = vunpack.c.l.b16 %v282
        %v386 = vunpack.c.h.b16 %v282
        %v387 = vunpack.c.l.b16 %v283
        %v388 = vunpack.c.h.b16 %v283
        %v389 = vunpack.c.l.b16 %v284
        %v390 = vunpack.c.h.b16 %v284
        %v391 = vunpack.c.l.b16 %v285
        %v392 = vunpack.c.h.b16 %v285
        %v393 = vunpack.c.l.b16 %v286
        %v394 = vunpack.c.h.b16 %v286
        %v395 = vunpack.c.l.b16 %v287
        %v396 = vunpack.c.h.b16 %v287
        %v397 = vunpack.c.l.b16 %v288
        %v398 = vunpack.c.h.b16 %v288
        %v399 = vunpack.c.l.b16 %v289
        %v400 = vunpack.c.h.b16 %v289
        %v401 = vunpack.c.l.b16 %v290
        %v402 = vunpack.c.h.b16 %v290
        %v403 = vunpack.c.l.b16 %v291
        %v404 = vunpack.c.h.b16 %v291
        %v405 = vunpack.c.l.b16 %v292
        %v406 = vunpack.c.h.b16 %v292
        %v407 = vunpack.c.l.b16 %v293
        %v408 = vunpack.c.h.b16 %v293
        %v409 = vunpack.c.l.b16 %v294
        %v410 = vunpack.c.h.b16 %v294
        %v411 = vunpack.c.l.b16 %v295
        %v412 = vunpack.c.h.b16 %v295
        %v413 = vunpack.c.l.b16 %v296
        %v414 = vunpack.c.h.b16 %v296
        %v415 = vpack.c.b16 %v355, %v351
        %v416 = vpack.c.b16 %v356, %v352
        %v417 = vpack.c.b16 %v357, %v353
        %v418 = vpack.c.b16 %v358, %v354
        %v419 = vpack.c.b16 %v363, %v359
        %v420 = vpack.c.b16 %v364, %v360
        %v421 = vpack.c.b16 %v365, %v361
        %v422 = vpack.c.b16 %v366, %v362
        %v423 = vpack.c.b16 %v371, %v367
        %v424 = vpack.c.b16 %v372, %v368
        %v425 = vpack.c.b16 %v373, %v369
        %v426 = vpack.c.b16 %v374, %v370
        %v427 = vpack.c.b16 %v379, %v375
        %v428 = vpack.c.b16 %v380, %v376
        %v429 = vpack.c.b16 %v381, %v377
        %v430 = vpack.c.b16 %v382, %v378
        %v431 = vpack.c.b16 %v387, %v383
        %v432 = vpack.c.b16 %v388, %v384
        %v433 = vpack.c.b16 %v389, %v385
        %v434 = vpack.c.b16 %v390, %v386
        %v435 = vpack.c.b16 %v395, %v391
        %v436 = vpack.c.b16 %v396, %v392
        %v437 = vpack.c.b16 %v397, %v393
        %v438 = vpack.c.b16 %v398, %v394
        %v439 = vpack.c.b16 %v403, %v399
        %v440 = vpack.c.b16 %v404, %v400
        %v441 = vpack.c.b16 %v405, %v401
        %v442 = vpack.c.b16 %v406, %v402
        %v443 = vpack.c.b16 %v411, %v407
        %v444 = vpack.c.b16 %v412, %v408
        %v445 = vpack.c.b16 %v413, %v409
        %v446 = vpack.c.b16 %v414, %v410
        %479 = vmatprep.subr.bf16.mxu0 %v416
        %480 = vmatpush1.bf16.msra.mxu0 %v415
        %481 = vmatprep.subr.bf16.mxu0 %v420
        %482 = vmatpush1.bf16.msra.mxu0 %v419
        %483 = vmatprep.subr.bf16.mxu0 %v424
        %484 = vmatpush1.bf16.msra.mxu0 %v423
        %485 = vmatprep.subr.bf16.mxu0 %v428
        %486 = vmatpush1.bf16.msra.mxu0 %v427
        %487 = vmatprep.subr.bf16.mxu0 %v432
        %488 = vmatpush1.bf16.msra.mxu0 %v431
        %489 = vmatprep.subr.bf16.mxu0 %v436
        %490 = vmatpush1.bf16.msra.mxu0 %v435
        %491 = vmatprep.subr.bf16.mxu0 %v440
        %492 = vmatpush1.bf16.msra.mxu0 %v439
        %493 = vmatprep.subr.bf16.mxu0 %v444
        %494 = vmatpush1.bf16.msra.mxu0 %v443
        %495 = vmatprep.subr.bf16.mxu0 0
        %496 = vmatpush1.bf16.msra.mxu0 0
        %497 = vmatprep.subr.bf16.mxu0 0
        %498 = vmatpush1.bf16.msra.mxu0 0
        %499 = vmatprep.subr.bf16.mxu0 0
        %500 = vmatpush1.bf16.msra.mxu0 0
        %501 = vmatprep.subr.bf16.mxu0 0
        %502 = vmatpush1.bf16.msra.mxu0 0
        %503 = vmatprep.subr.bf16.mxu0 0
        %504 = vmatpush1.bf16.msra.mxu0 0
        %505 = vmatprep.subr.bf16.mxu0 0
        %506 = vmatpush1.bf16.msra.mxu0 0
        %507 = vmatprep.subr.bf16.mxu0 0
        %508 = vmatpush1.bf16.msra.mxu0 0
        %509 = vmatprep.subr.bf16.mxu0 0
        %510 = vmatpush1.bf16.msra.mxu0 0
        %511 = vmatprep.mubr.bf16.mxu0 0
        %512 = vmatmul.mubr.bf16.gmra.mrb[0].mxu0 %v263
        %v513 = vpop.f32.mrb[0].mxu0
        %v514 = vadd.f32 %v302, %v513
        %v515 = vpop.f32.mrb[0].mxu0
        %v516 = vadd.f32 %v306, %v515
        %v517 = vpop.f32.mrb[0].mxu0
        %v518 = vadd.f32 %v302, %v517
        %v519 = vpop.f32.mrb[0].mxu0
        %v520 = vadd.f32 %v306, %v519
        %521 = vmatprep.mubr.bf16.mxu0 0
        %522 = vmatmul.mubr.bf16.gmra.mrb[0].mxu0 %v264
        %v523 = vpop.f32.mrb[0].mxu0
        %v524 = vadd.f32 %v302, %v523
        %v525 = vpop.f32.mrb[0].mxu0
        %v526 = vadd.f32 %v306, %v525
        %v527 = vpop.f32.mrb[0].mxu0
        %v528 = vadd.f32 %v302, %v527
        %v529 = vpop.f32.mrb[0].mxu0
        %v530 = vadd.f32 %v306, %v529
        %531 = vdwg.mxu0
        %532 = vmatprep.subr.bf16.mxu0 %v418
        %533 = vmatpush1.bf16.msra.mxu0 %v417
        %534 = vmatprep.subr.bf16.mxu0 %v422
        %535 = vmatpush1.bf16.msra.mxu0 %v421
        %536 = vmatprep.subr.bf16.mxu0 %v426
        %537 = vmatpush1.bf16.msra.mxu0 %v425
        %538 = vmatprep.subr.bf16.mxu0 %v430
        %539 = vmatpush1.bf16.msra.mxu0 %v429
        %540 = vmatprep.subr.bf16.mxu0 %v434
        %541 = vmatpush1.bf16.msra.mxu0 %v433
        %542 = vmatprep.subr.bf16.mxu0 %v438
        %543 = vmatpush1.bf16.msra.mxu0 %v437
        %544 = vmatprep.subr.bf16.mxu0 %v442
        %545 = vmatpush1.bf16.msra.mxu0 %v441
        %546 = vmatprep.subr.bf16.mxu0 %v446
        %547 = vmatpush1.bf16.msra.mxu0 %v445
        %548 = vmatprep.subr.bf16.mxu0 0
        %549 = vmatpush1.bf16.msra.mxu0 0
        %550 = vmatprep.subr.bf16.mxu0 0
        %551 = vmatpush1.bf16.msra.mxu0 0
        %552 = vmatprep.subr.bf16.mxu0 0
        %553 = vmatpush1.bf16.msra.mxu0 0
        %554 = vmatprep.subr.bf16.mxu0 0
        %555 = vmatpush1.bf16.msra.mxu0 0
        %556 = vmatprep.subr.bf16.mxu0 0
        %557 = vmatpush1.bf16.msra.mxu0 0
        %558 = vmatprep.subr.bf16.mxu0 0
        %559 = vmatpush1.bf16.msra.mxu0 0
        %560 = vmatprep.subr.bf16.mxu0 0
        %561 = vmatpush1.bf16.msra.mxu0 0
        %562 = vmatprep.subr.bf16.mxu0 0
        %563 = vmatpush1.bf16.msra.mxu0 0
        %564 = vmatprep.mubr.bf16.mxu0 0
        %565 = vmatmul.mubr.bf16.gmra.mrb[0].mxu0 %v263
        %v566 = vpop.f32.mrb[0].mxu0
        %v567 = vadd.f32 %v310, %v566
        %v568 = vpop.f32.mrb[0].mxu0
        %v569 = vadd.f32 %v314, %v568
        %v570 = vpop.f32.mrb[0].mxu0
        %v571 = vadd.f32 %v310, %v570
        %v572 = vpop.f32.mrb[0].mxu0
        %v573 = vadd.f32 %v314, %v572
        %574 = vmatprep.mubr.bf16.mxu0 0
        %575 = vmatmul.mubr.bf16.gmra.mrb[0].mxu0 %v264
        %v576 = vpop.f32.mrb[0].mxu0
        %v577 = vadd.f32 %v310, %v576
        %v578 = vpop.f32.mrb[0].mxu0
        %v579 = vadd.f32 %v314, %v578
        %v580 = vpop.f32.mrb[0].mxu0
        %v581 = vadd.f32 %v310, %v580
        %v582 = vpop.f32.mrb[0].mxu0
        %v583 = vadd.f32 %v314, %v582
        %584 = vdwg.mxu0
        %v585 = vxor.u32 %v514, 2147483648
        %v586 = vxor.u32 %v516, 2147483648
        %v587 = vxor.u32 %v567, 2147483648
        %v588 = vxor.u32 %v569, 2147483648
        %v589 = vxor.u32 %v518, 2147483648
        %v590 = vxor.u32 %v520, 2147483648
        %v591 = vxor.u32 %v571, 2147483648
        %v592 = vxor.u32 %v573, 2147483648
        %v593 = vxor.u32 %v524, 2147483648
        %v594 = vxor.u32 %v526, 2147483648
        %v595 = vxor.u32 %v577, 2147483648
        %v596 = vxor.u32 %v579, 2147483648
        %v597 = vxor.u32 %v528, 2147483648
        %v598 = vxor.u32 %v530, 2147483648
        %v599 = vxor.u32 %v581, 2147483648
        %v600 = vxor.u32 %v583, 2147483648
        %v601 = vmul.f32 %v585, 1.442695
        %v602 = vpow.pop %v601
        %v603 = vmul.f32 %v586, 1.442695
        %v604 = vpow.pop %v603
        %v605 = vmul.f32 %v587, 1.442695
        %v606 = vpow.pop %v605
        %v607 = vmul.f32 %v588, 1.442695
        %v608 = vpow.pop %v607
        %v609 = vmul.f32 %v589, 1.442695
        %v610 = vpow.pop %v609
        %v611 = vmul.f32 %v590, 1.442695
        %v612 = vpow.pop %v611
        %v613 = vmul.f32 %v591, 1.442695
        %v614 = vpow.pop %v613
        %v615 = vmul.f32 %v592, 1.442695
        %v616 = vpow.pop %v615
        %v617 = vmul.f32 %v593, 1.442695
        %v618 = vpow.pop %v617
        %v619 = vmul.f32 %v594, 1.442695
        %v620 = vpow.pop %v619
        %v621 = vmul.f32 %v595, 1.442695
        %v622 = vpow.pop %v621
        %v623 = vmul.f32 %v596, 1.442695
        %v624 = vpow.pop %v623
        %v625 = vmul.f32 %v597, 1.442695
        %v626 = vpow.pop %v625
        %v627 = vmul.f32 %v598, 1.442695
        %v628 = vpow.pop %v627
        %v629 = vmul.f32 %v599, 1.442695
        %v630 = vpow.pop %v629
        %v631 = vmul.f32 %v600, 1.442695
        %v632 = vpow.pop %v631
        %v633 = vadd.f32 %v602, 1.0
        %v634 = vadd.f32 %v604, 1.0
        %v635 = vadd.f32 %v606, 1.0
        %v636 = vadd.f32 %v608, 1.0
        %v637 = vadd.f32 %v610, 1.0
        %v638 = vadd.f32 %v612, 1.0
        %v639 = vadd.f32 %v614, 1.0
        %v640 = vadd.f32 %v616, 1.0
        %v641 = vadd.f32 %v618, 1.0
        %v642 = vadd.f32 %v620, 1.0
        %v643 = vadd.f32 %v622, 1.0
        %v644 = vadd.f32 %v624, 1.0
        %v645 = vadd.f32 %v626, 1.0
        %v646 = vadd.f32 %v628, 1.0
        %v647 = vadd.f32 %v630, 1.0
        %v648 = vadd.f32 %v632, 1.0
        %v649 = vrcp.pop %v633
        %v650 = vmul.f32 1.0, %v649
        %v651 = vrcp.pop %v634
        %v652 = vmul.f32 1.0, %v651
        %v653 = vrcp.pop %v635
        %v654 = vmul.f32 1.0, %v653
        %v655 = vrcp.pop %v636
        %v656 = vmul.f32 1.0, %v655
        %v657 = vrcp.pop %v637
        %v658 = vmul.f32 1.0, %v657
        %v659 = vrcp.pop %v638
        %v660 = vmul.f32 1.0, %v659
        %v661 = vrcp.pop %v639
        %v662 = vmul.f32 1.0, %v661
        %v663 = vrcp.pop %v640
        %v664 = vmul.f32 1.0, %v663
        %v665 = vrcp.pop %v641
        %v666 = vmul.f32 1.0, %v665
        %v667 = vrcp.pop %v642
        %v668 = vmul.f32 1.0, %v667
        %v669 = vrcp.pop %v643
        %v670 = vmul.f32 1.0, %v669
        %v671 = vrcp.pop %v644
        %v672 = vmul.f32 1.0, %v671
        %v673 = vrcp.pop %v645
        %v674 = vmul.f32 1.0, %v673
        %v675 = vrcp.pop %v646
        %v676 = vmul.f32 1.0, %v675
        %v677 = vrcp.pop %v647
        %v678 = vmul.f32 1.0, %v677
        %v679 = vrcp.pop %v648
        %v680 = vmul.f32 1.0, %v679
        %v681 = vmul.f32 %v514, %v650
        %v682 = vmul.f32 %v516, %v652
        %v683 = vmul.f32 %v567, %v654
        %v684 = vmul.f32 %v569, %v656
        %v685 = vmul.f32 %v518, %v658
        %v686 = vmul.f32 %v520, %v660
        %v687 = vmul.f32 %v571, %v662
        %v688 = vmul.f32 %v573, %v664
        %v689 = vmul.f32 %v524, %v666
        %v690 = vmul.f32 %v526, %v668
        %v691 = vmul.f32 %v577, %v670
        %v692 = vmul.f32 %v579, %v672
        %v693 = vmul.f32 %v528, %v674
        %v694 = vmul.f32 %v530, %v676
        %v695 = vmul.f32 %v581, %v678
        %v696 = vmul.f32 %v583, %v680
        %v697 = vpack.c.bf16 %v685, %v681
        %v698 = vpack.c.bf16 %v686, %v682
        %v699 = vpack.c.bf16 %v687, %v683
        %v700 = vpack.c.bf16 %v688, %v684
        %v701 = vpack.c.bf16 %v693, %v689
        %v702 = vpack.c.bf16 %v694, %v690
        %v703 = vpack.c.bf16 %v695, %v691
        %v704 = vpack.c.bf16 %v696, %v692
        %v705 = vld [vmem:[#allocation4] sm:$0xf]
        %v706 = vld [vmem:[#allocation4 + $0x4] sm:$0xf]
        %v707 = vld [vmem:[#allocation4 + $0x8] sm:$0xf]
        %v708 = vld [vmem:[#allocation4 + $0xc] sm:$0xf]
        %v709 = vld [vmem:[#allocation4 + $0x10] sm:$0xf]
        %v710 = vld [vmem:[#allocation4 + $0x14] sm:$0xf]
        %v711 = vld [vmem:[#allocation4 + $0x18] sm:$0xf]
        %v712 = vld [vmem:[#allocation4 + $0x1c] sm:$0xf]
        %v713 = vld [vmem:[#allocation4 + $0x20] sm:$0xf]
        %v714 = vld [vmem:[#allocation4 + $0x24] sm:$0xf]
        %v715 = vld [vmem:[#allocation4 + $0x28] sm:$0xf]
        %v716 = vld [vmem:[#allocation4 + $0x2c] sm:$0xf]
        %v717 = vld [vmem:[#allocation4 + $0x30] sm:$0xf]
        %v718 = vld [vmem:[#allocation4 + $0x34] sm:$0xf]
        %v719 = vld [vmem:[#allocation4 + $0x38] sm:$0xf]
        %v720 = vld [vmem:[#allocation4 + $0x3c] sm:$0xf]
        %v721 = vld [vmem:[#allocation4 + $0x40] sm:$0xf]
        %v722 = vld [vmem:[#allocation4 + $0x44] sm:$0xf]
        %v723 = vld [vmem:[#allocation4 + $0x48] sm:$0xf]
        %v724 = vld [vmem:[#allocation4 + $0x4c] sm:$0xf]
        %v725 = vld [vmem:[#allocation4 + $0x50] sm:$0xf]
        %v726 = vld [vmem:[#allocation4 + $0x54] sm:$0xf]
        %v727 = vld [vmem:[#allocation4 + $0x58] sm:$0xf]
        %v728 = vld [vmem:[#allocation4 + $0x5c] sm:$0xf]
        %v729 = vld [vmem:[#allocation4 + $0x60] sm:$0xf]
        %v730 = vld [vmem:[#allocation4 + $0x64] sm:$0xf]
        %v731 = vld [vmem:[#allocation4 + $0x68] sm:$0xf]
        %v732 = vld [vmem:[#allocation4 + $0x6c] sm:$0xf]
        %v733 = vld [vmem:[#allocation4 + $0x70] sm:$0xf]
        %v734 = vld [vmem:[#allocation4 + $0x74] sm:$0xf]
        %v735 = vld [vmem:[#allocation4 + $0x78] sm:$0xf]
        %v736 = vld [vmem:[#allocation4 + $0x7c] sm:$0xf]
        %v737 = vld [vmem:[#allocation4 + $0x80] sm:$0xf]
        %v738 = vld [vmem:[#allocation4 + $0x84] sm:$0xf]
        %v739 = vld [vmem:[#allocation4 + $0x88] sm:$0xf]
        %v740 = vld [vmem:[#allocation4 + $0x8c] sm:$0xf]
        %v741 = vld [vmem:[#allocation4 + $0x90] sm:$0xf]
        %v742 = vld [vmem:[#allocation4 + $0x94] sm:$0xf]
        %v743 = vld [vmem:[#allocation4 + $0x98] sm:$0xf]
        %v744 = vld [vmem:[#allocation4 + $0x9c] sm:$0xf]
        %v745 = vld [vmem:[#allocation4 + $0xa0] sm:$0xf]
        %v746 = vld [vmem:[#allocation4 + $0xa4] sm:$0xf]
        %v747 = vld [vmem:[#allocation4 + $0xa8] sm:$0xf]
        %v748 = vld [vmem:[#allocation4 + $0xac] sm:$0xf]
        %v749 = vld [vmem:[#allocation4 + $0xb0] sm:$0xf]
        %v750 = vld [vmem:[#allocation4 + $0xb4] sm:$0xf]
        %v751 = vld [vmem:[#allocation4 + $0xb8] sm:$0xf]
        %v752 = vld [vmem:[#allocation4 + $0xbc] sm:$0xf]
        %v753 = vld [vmem:[#allocation4 + $0xc0] sm:$0xf]
        %v754 = vld [vmem:[#allocation4 + $0xc4] sm:$0xf]
        %v755 = vld [vmem:[#allocation4 + $0xc8] sm:$0xf]
        %v756 = vld [vmem:[#allocation4 + $0xcc] sm:$0xf]
        %v757 = vld [vmem:[#allocation4 + $0xd0] sm:$0xf]
        %v758 = vld [vmem:[#allocation4 + $0xd4] sm:$0xf]
        %v759 = vld [vmem:[#allocation4 + $0xd8] sm:$0xf]
        %v760 = vld [vmem:[#allocation4 + $0xdc] sm:$0xf]
        %v761 = vld [vmem:[#allocation4 + $0xe0] sm:$0xf]
        %v762 = vld [vmem:[#allocation4 + $0xe4] sm:$0xf]
        %v763 = vld [vmem:[#allocation4 + $0xe8] sm:$0xf]
        %v764 = vld [vmem:[#allocation4 + $0xec] sm:$0xf]
        %v765 = vld [vmem:[#allocation4 + $0xf0] sm:$0xf]
        %v766 = vld [vmem:[#allocation4 + $0xf4] sm:$0xf]
        %v767 = vld [vmem:[#allocation4 + $0xf8] sm:$0xf]
        %v768 = vld [vmem:[#allocation4 + $0xfc] sm:$0xf]
        %v769 = vld [vmem:[%s4] sm:$0x1]
        %v771 = vlaneseq
        %v772 = vshrl.u32 %v771, 7
        %v773 = vsub.s32 0, %v772
        %v774 = vrot.slane %v769, %v773
        %v840 = vunpack.c.l.b16 %v705
        %v841 = vunpack.c.l.b16 %v706
        %v842 = vunpack.c.l.b16 %v707
        %v843 = vunpack.c.l.b16 %v708
        %v844 = vunpack.c.l.b16 %v709
        %v845 = vunpack.c.l.b16 %v710
        %v846 = vunpack.c.l.b16 %v711
        %v847 = vunpack.c.l.b16 %v712
        %v848 = vunpack.c.l.b16 %v713
        %v849 = vunpack.c.l.b16 %v714
        %v850 = vunpack.c.l.b16 %v715
        %v851 = vunpack.c.l.b16 %v716
        %v852 = vunpack.c.l.b16 %v717
        %v853 = vunpack.c.l.b16 %v718
        %v854 = vunpack.c.l.b16 %v719
        %v855 = vunpack.c.l.b16 %v720
        %v856 = vunpack.c.l.b16 %v721
        %v857 = vunpack.c.l.b16 %v722
        %v858 = vunpack.c.l.b16 %v723
        %v859 = vunpack.c.l.b16 %v724
        %v860 = vunpack.c.l.b16 %v725
        %v861 = vunpack.c.l.b16 %v726
        %v862 = vunpack.c.l.b16 %v727
        %v863 = vunpack.c.l.b16 %v728
        %v864 = vunpack.c.l.b16 %v729
        %v865 = vunpack.c.l.b16 %v730
        %v866 = vunpack.c.l.b16 %v731
        %v867 = vunpack.c.l.b16 %v732
        %v868 = vunpack.c.l.b16 %v733
        %v869 = vunpack.c.l.b16 %v734
        %v870 = vunpack.c.l.b16 %v735
        %v871 = vunpack.c.l.b16 %v736
        %v872 = vunpack.c.l.b16 %v737
        %v873 = vunpack.c.l.b16 %v738
        %v874 = vunpack.c.l.b16 %v739
        %v875 = vunpack.c.l.b16 %v740
        %v876 = vunpack.c.l.b16 %v741
        %v877 = vunpack.c.l.b16 %v742
        %v878 = vunpack.c.l.b16 %v743
        %v879 = vunpack.c.l.b16 %v744
        %v880 = vunpack.c.l.b16 %v745
        %v881 = vunpack.c.l.b16 %v746
        %v882 = vunpack.c.l.b16 %v747
        %v883 = vunpack.c.l.b16 %v748
        %v884 = vunpack.c.l.b16 %v749
        %v885 = vunpack.c.l.b16 %v750
        %v886 = vunpack.c.l.b16 %v751
        %v887 = vunpack.c.l.b16 %v752
        %v888 = vunpack.c.l.b16 %v753
        %v889 = vunpack.c.l.b16 %v754
        %v890 = vunpack.c.l.b16 %v755
        %v891 = vunpack.c.l.b16 %v756
        %v892 = vunpack.c.l.b16 %v757
        %v893 = vunpack.c.l.b16 %v758
        %v894 = vunpack.c.l.b16 %v759
        %v895 = vunpack.c.l.b16 %v760
        %v896 = vunpack.c.l.b16 %v761
        %v897 = vunpack.c.l.b16 %v762
        %v898 = vunpack.c.l.b16 %v763
        %v899 = vunpack.c.l.b16 %v764
        %v900 = vunpack.c.l.b16 %v765
        %v901 = vunpack.c.l.b16 %v766
        %v902 = vunpack.c.l.b16 %v767
        %v903 = vunpack.c.l.b16 %v768
        %v904 = vpack.c.b16 %v841, %v840
        %v905 = vpack.c.b16 %v843, %v842
        %v906 = vpack.c.b16 %v845, %v844
        %v907 = vpack.c.b16 %v847, %v846
        %v908 = vpack.c.b16 %v849, %v848
        %v909 = vpack.c.b16 %v851, %v850
        %v910 = vpack.c.b16 %v853, %v852
        %v911 = vpack.c.b16 %v855, %v854
        %v912 = vpack.c.b16 %v857, %v856
        %v913 = vpack.c.b16 %v859, %v858
        %v914 = vpack.c.b16 %v861, %v860
        %v915 = vpack.c.b16 %v863, %v862
        %v916 = vpack.c.b16 %v865, %v864
        %v917 = vpack.c.b16 %v867, %v866
        %v918 = vpack.c.b16 %v869, %v868
        %v919 = vpack.c.b16 %v871, %v870
        %v920 = vpack.c.b16 %v873, %v872
        %v921 = vpack.c.b16 %v875, %v874
        %v922 = vpack.c.b16 %v877, %v876
        %v923 = vpack.c.b16 %v879, %v878
        %v924 = vpack.c.b16 %v881, %v880
        %v925 = vpack.c.b16 %v883, %v882
        %v926 = vpack.c.b16 %v885, %v884
        %v927 = vpack.c.b16 %v887, %v886
        %v928 = vpack.c.b16 %v889, %v888
        %v929 = vpack.c.b16 %v891, %v890
        %v930 = vpack.c.b16 %v893, %v892
        %v931 = vpack.c.b16 %v895, %v894
        %v932 = vpack.c.b16 %v897, %v896
        %v933 = vpack.c.b16 %v899, %v898
        %v934 = vpack.c.b16 %v901, %v900
        %v935 = vpack.c.b16 %v903, %v902
        %968 = vmatprep.subr.bf16.mxu0 0
        %969 = vmatpush1.bf16.msra.mxu0 %v904
        %970 = vmatprep.subr.bf16.mxu0 0
        %971 = vmatpush1.bf16.msra.mxu0 %v905
        %972 = vmatprep.subr.bf16.mxu0 0
        %973 = vmatpush1.bf16.msra.mxu0 %v906
        %974 = vmatprep.subr.bf16.mxu0 0
        %975 = vmatpush1.bf16.msra.mxu0 %v907
        %976 = vmatprep.subr.bf16.mxu0 0
        %977 = vmatpush1.bf16.msra.mxu0 %v908
        %978 = vmatprep.subr.bf16.mxu0 0
        %979 = vmatpush1.bf16.msra.mxu0 %v909
        %980 = vmatprep.subr.bf16.mxu0 0
        %981 = vmatpush1.bf16.msra.mxu0 %v910
        %982 = vmatprep.subr.bf16.mxu0 0
        %983 = vmatpush1.bf16.msra.mxu0 %v911
        %984 = vmatprep.subr.bf16.mxu0 0
        %985 = vmatpush1.bf16.msra.mxu0 %v912
        %986 = vmatprep.subr.bf16.mxu0 0
        %987 = vmatpush1.bf16.msra.mxu0 %v913
        %988 = vmatprep.subr.bf16.mxu0 0
        %989 = vmatpush1.bf16.msra.mxu0 %v914
        %990 = vmatprep.subr.bf16.mxu0 0
        %991 = vmatpush1.bf16.msra.mxu0 %v915
        %992 = vmatprep.subr.bf16.mxu0 0
        %993 = vmatpush1.bf16.msra.mxu0 %v916
        %994 = vmatprep.subr.bf16.mxu0 0
        %995 = vmatpush1.bf16.msra.mxu0 %v917
        %996 = vmatprep.subr.bf16.mxu0 0
        %997 = vmatpush1.bf16.msra.mxu0 %v918
        %998 = vmatprep.subr.bf16.mxu0 0
        %999 = vmatpush1.bf16.msra.mxu0 %v919
        %1000 = vmatprep.mubr.bf16.mxu0 %v698
        %1001 = vmatmul.mubr.bf16.gmra.mrb[0].mxu0 %v697
        %v1002 = vpop.f32.mrb[0].mxu0
        %v1003 = vadd.f32 %v774, %v1002
        %v1004 = vpop.f32.mrb[0].mxu0
        %v1005 = vpop.f32.mrb[0].mxu0
        %v1006 = vadd.f32 %v774, %v1005
        %v1007 = vpop.f32.mrb[0].mxu0
        %1008 = vmatprep.mubr.bf16.mxu0 %v702
        %1009 = vmatmul.mubr.bf16.gmra.mrb[0].mxu0 %v701
        %v1010 = vpop.f32.mrb[0].mxu0
        %v1011 = vadd.f32 %v774, %v1010
        %v1012 = vpop.f32.mrb[0].mxu0
        %v1013 = vpop.f32.mrb[0].mxu0
        %v1014 = vadd.f32 %v774, %v1013
        %v1015 = vpop.f32.mrb[0].mxu0
        %1016 = vdwg.mxu0
        %1017 = vmatprep.subr.bf16.mxu0 0
        %1018 = vmatpush1.bf16.msra.mxu0 %v920
        %1019 = vmatprep.subr.bf16.mxu0 0
        %1020 = vmatpush1.bf16.msra.mxu0 %v921
        %1021 = vmatprep.subr.bf16.mxu0 0
        %1022 = vmatpush1.bf16.msra.mxu0 %v922
        %1023 = vmatprep.subr.bf16.mxu0 0
        %1024 = vmatpush1.bf16.msra.mxu0 %v923
        %1025 = vmatprep.subr.bf16.mxu0 0
        %1026 = vmatpush1.bf16.msra.mxu0 %v924
        %1027 = vmatprep.subr.bf16.mxu0 0
        %1028 = vmatpush1.bf16.msra.mxu0 %v925
        %1029 = vmatprep.subr.bf16.mxu0 0
        %1030 = vmatpush1.bf16.msra.mxu0 %v926
        %1031 = vmatprep.subr.bf16.mxu0 0
        %1032 = vmatpush1.bf16.msra.mxu0 %v927
        %1033 = vmatprep.subr.bf16.mxu0 0
        %1034 = vmatpush1.bf16.msra.mxu0 %v928
        %1035 = vmatprep.subr.bf16.mxu0 0
        %1036 = vmatpush1.bf16.msra.mxu0 %v929
        %1037 = vmatprep.subr.bf16.mxu0 0
        %1038 = vmatpush1.bf16.msra.mxu0 %v930
        %1039 = vmatprep.subr.bf16.mxu0 0
        %1040 = vmatpush1.bf16.msra.mxu0 %v931
        %1041 = vmatprep.subr.bf16.mxu0 0
        %1042 = vmatpush1.bf16.msra.mxu0 %v932
        %1043 = vmatprep.subr.bf16.mxu0 0
        %1044 = vmatpush1.bf16.msra.mxu0 %v933
        %1045 = vmatprep.subr.bf16.mxu0 0
        %1046 = vmatpush1.bf16.msra.mxu0 %v934
        %1047 = vmatprep.subr.bf16.mxu0 0
        %1048 = vmatpush1.bf16.msra.mxu0 %v935
        %1049 = vmatprep.mubr.bf16.mxu0 %v700
        %1050 = vmatmul.mubr.bf16.gmra.mrb[0].mxu0 %v699
        %v1051 = vpop.f32.mrb[0].mxu0
        %v1052 = vadd.f32 %v1003, %v1051
        %v1053 = vpop.f32.mrb[0].mxu0
        %v1054 = vpop.f32.mrb[0].mxu0
        %v1055 = vadd.f32 %v1006, %v1054
        %v1056 = vpop.f32.mrb[0].mxu0
        %1057 = vmatprep.mubr.bf16.mxu0 %v704
        %1058 = vmatmul.mubr.bf16.gmra.mrb[0].mxu0 %v703
        %v1059 = vpop.f32.mrb[0].mxu0
        %v1060 = vadd.f32 %v1011, %v1059
        %v1061 = vpop.f32.mrb[0].mxu0
        %v1062 = vpop.f32.mrb[0].mxu0
        %v1063 = vadd.f32 %v1014, %v1062
        %v1064 = vpop.f32.mrb[0].mxu0
        %1065 = vdwg.mxu0
        %1066 = vst [vmem:[%s256] sm:$0xff] %v1052
        %1067 = vst [vmem:[%s256 + $0x8] sm:$0xff] %v1055
        %1068 = vst [vmem:[%s256 + $0x10] sm:$0xff] %v1060
        %1069 = vst [vmem:[%s256 + $0x18] sm:$0xff] %v1063
        %s1070 = smul.u32 4, %s18
        %p1071 = scmp.lt.s32.totalorder %s1070, 7
        %s1072 = scalar_select %p1071, %s1070, 7
        %s1073 = smul.addr %s1072, 8
        %s1074 = scalar_lea.vmem %s5, %s1073
        // Predicated region
        $region49: #{feedforward.1} parent=39 // pred_check
          %p1075 = pneg %p146
        $region50: #{feedforward.1} parent=39 // pred_check_branch
          %1077 = sbr.rel (%p1075) target = $region52
        $region51: #{feedforward.1} parent=39 // pred_region
          %s1078 = smul.u32 4, %s18
        $region52: #{feedforward.1} parent=39 // pred_fallthru
          _
      $region40: #{feedforward.1} parent=5 // pred_fallthru
        _
      %p1079 = scmp.le.s32.totalorder 2, %s13
      // Predicated region
      $region53: #{feedforward.1} parent=5 // pred_check
        %p1080 = pneg %p1079
      $region54: #{feedforward.1} parent=5 // pred_check_branch
        %1082 = sbr.rel (%p1080) target = $region56
      $region55: #{feedforward.1} parent=5 // pred_region
        %s1083 = ssub.s32 %s13, 2
        // Predicated region
        $region57: #{feedforward.1} parent=55 // pred_check
          %p1084 = pneg %p152
        $region58: #{feedforward.1} parent=55 // pred_check_branch
          %1086 = sbr.rel (%p1084) target = $region60
        $region59: #{feedforward.1} parent=55 // pred_region
          %s1087 = smul.u32 4, %s19
          %p1088 = scmp.lt.s32.totalorder %s1087, 7
          %s1089 = scalar_select %p1088, %s1087, 7
          %s1090 = smul.addr %s1089, 8
          %s1091 = scalar_lea.vmem %s5, %s1090
        $region60: #{feedforward.1} parent=55 // pred_fallthru
          _
      $region56: #{feedforward.1} parent=5 // pred_fallthru
        _
    $region6: #{feedforward.1} parent=1 // loop_footer
      %s17 = sadd.s32 1, %s13
    $region7: #{feedforward.1} parent=1 // loop_footer_branch
      %12 = sbr.rel target = $region3
    $region8: #{feedforward.1} parent=1 // loop_exit
      _
    %1092 = vsyncpa [#allocation3], 1
    %s1093 = scalar_lea.sflag [#allocation3], 1
    %1094 = vsyncpa %s1093, 1
    %1095 = vsyncpa [#allocation5], 1

</llo_original>
